<compile_context>
chip_gen: v7x
topology: tpu7x:2x2x1
jax: 0.10.0
libtpu: 0.0.40
codegen_flags: <defaults>
</compile_context>

<pallas_src>
import functools

import jax
import jax.numpy as jnp
from jax.experimental import pallas as pl
from jax.experimental.pallas import tpu as pltpu

EPS = 1e-5  # PyTorch BatchNorm2d default eps


# ----------------------------- small helpers --------------------------------

def _round_up(x, m):
    return ((x + m - 1) // m) * m


def _pick_m(m):
    """Row tile: full (16-aligned) extent when small, else 256-row tiles."""
    if m <= 256:
        tm = _round_up(max(m, 16), 16)
        return tm, tm
    return 256, _round_up(m, 256)


def _pick_n(np_):
    if np_ <= 512:
        return np_
    for c in (512, 256, 128):
        if np_ % c == 0:
            return c
    return 128


def _pick_k(kp):
    if kp <= 512:
        return kp
    for c in (512, 256, 128):
        if kp % c == 0:
            return c
    return 128


def _vmem_limit(block_bytes, scratch_bytes=0):
    """Footprint-derived scoped VMEM limit (double-buffered blocks + scratch),
    clamped to [16 MiB, 48 MiB] so it is legal on v5e/v6e/v7x."""
    est = 2 * block_bytes + scratch_bytes + 4 * 1024 * 1024
    return int(min(48 * 1024 * 1024, max(est, 16 * 1024 * 1024)))


# ----------------------------- Pallas kernels -------------------------------

def _mm_kernel(x_ref, w_ref, s_ref, b_ref, *rest, relu, has_res):
    """acc += x @ w (bf16 MXU, f32 acc);
    epilogue: out = act(acc * scale + bias [+ residual])."""
    if has_res:
        r_ref, o_ref, acc_ref = rest
    else:
        r_ref = None
        o_ref, acc_ref = rest
    k = pl.program_id(2)

    @pl.when(k == 0)
    def _():
        acc_ref[...] = jnp.zeros_like(acc_ref)

    acc_ref[...] += jnp.dot(x_ref[...], w_ref[...],
                            preferred_element_type=jnp.float32)

    @pl.when(k == pl.num_programs(2) - 1)
    def _():
        r = acc_ref[...] * s_ref[...] + b_ref[...]
        if has_res:
            r = r + r_ref[...]
        if relu:
            r = jnp.maximum(r, 0.0)
        o_ref[...] = r.astype(o_ref.dtype)


def _conv3x3_kernel(xa_ref, xb_ref, w_ref, s_ref, b_ref, o_ref,
                    tmp_ref, im_ref, *, shifts, sh, tm, tk, relu):
    """3x3 / stride-1 conv tile without any HBM im2col.

    xa/xb are consecutive tm-row blocks of the flattened padded activation:
    together they cover rows [i*tm, i*tm + tm + sh).  The 9 shifted taps are
    assembled into a VMEM im2col block, then one bf16 MXU matmul is issued."""
    tmp_ref[0:tm, :] = xa_ref[...]
    tmp_ref[tm:tm + sh, :] = xb_ref[0:sh, :]
    for t, s in enumerate(shifts):
        im_ref[:, t * tk:(t + 1) * tk] = tmp_ref[s:s + tm, :].astype(jnp.bfloat16)
    r = jnp.dot(im_ref[...], w_ref[...], preferred_element_type=jnp.float32)
    r = r * s_ref[...] + b_ref[...]
    if relu:
        r = jnp.maximum(r, 0.0)
    o_ref[...] = r.astype(o_ref.dtype)


def _maxpool_kernel(p_ref, o_ref):
    # p_ref: (9, tm, C) stacked window patches -> elementwise max over taps.
    o_ref[...] = jnp.max(p_ref[...], axis=0)


def _avgpool_kernel(x_ref, o_ref, *, inv_hw):
    # x_ref: (tb, HWp, tc); padded positions are zero -> sum then scale.
    o_ref[...] = jnp.sum(x_ref[...], axis=1) * inv_hw


# ----------------------------- kernel wrappers -------------------------------

def matmul_bn_act(x2d, prep, relu, residual=None):
    """x2d:(M,K) f32 -> act((x2d @ W) * scale + bias [+ residual]) : (M, cout)."""
    M, K = x2d.shape
    Kp, Np = prep['w'].shape
    cout = prep['cout']
    tm, Mp = _pick_m(M)
    tk = _pick_k(Kp)
    tn = _pick_n(Np)

    xb = x2d.astype(jnp.bfloat16)
    if Mp != M or Kp != K:
        xb = jnp.pad(xb, ((0, Mp - M), (0, Kp - K)))

    in_specs = [
        pl.BlockSpec((tm, tk), lambda i, j, k: (i, k)),
        pl.BlockSpec((tk, tn), lambda i, j, k: (k, j)),
        pl.BlockSpec((1, tn), lambda i, j, k: (0, j)),
        pl.BlockSpec((1, tn), lambda i, j, k: (0, j)),
    ]
    args = [xb, prep['w'], prep['scale'], prep['bias']]
    has_res = residual is not None
    if has_res:
        res = residual.astype(jnp.float32)
        if Mp != M or Np != res.shape[1]:
            res = jnp.pad(res, ((0, Mp - M), (0, Np - res.shape[1])))
        in_specs.append(pl.BlockSpec((tm, tn), lambda i, j, k: (i, j)))
        args.append(res)

    block_bytes = (tm * tk * 2 + tk * tn * 2 + 2 * tn * 4 + tm * tn * 4
                   + (tm * tn * 4 if has_res else 0))
    out = pl.pallas_call(
        functools.partial(_mm_kernel, relu=relu, has_res=has_res),
        out_shape=jax.ShapeDtypeStruct((Mp, Np), jnp.float32),
        grid_spec=pltpu.PrefetchScalarGridSpec(
            num_scalar_prefetch=0,
            grid=(Mp // tm, Np // tn, Kp // tk),
            in_specs=in_specs,
            out_specs=pl.BlockSpec((tm, tn), lambda i, j, k: (i, j)),
            scratch_shapes=[pltpu.VMEM((tm, tn), jnp.float32)],
        ),
        compiler_params=pltpu.CompilerParams(
            dimension_semantics=("parallel", "parallel", "arbitrary"),
            vmem_limit_bytes=_vmem_limit(block_bytes, tm * tn * 4),
        ),
    )(*args)
    return out[:M, :cout]


def conv_im2col_bn_act(x, prep, relu, residual=None):
    """General conv + folded BN (+ReLU) via im2col + the tiled matmul.
    Used for the 7x7 stem, stride-2 3x3 convs and as a fallback."""
    n, h, w, cin = x.shape
    kh, kw = prep['kh'], prep['kw']
    stride, padding = prep['stride'], prep['padding']
    ho = (h + 2 * padding - kh) // stride + 1
    wo = (w + 2 * padding - kw) // stride + 1
    if padding > 0:
        x = jnp.pad(x, ((0, 0), (padding, padding), (padding, padding), (0, 0)))
    patches = [x[:, ki:ki + stride * ho:stride, kj:kj + stride * wo:stride, :]
               for ki in range(kh) for kj in range(kw)]
    pat = jnp.stack(patches, axis=3).reshape(n * ho * wo, kh * kw * cin)
    res2d = residual.reshape(n * ho * wo, -1) if residual is not None else None
    out = matmul_bn_act(pat, prep, relu, residual=res2d)
    return out.reshape(n, ho, wo, prep['cout'])


_DIRECT_3X3_OK = True  # flips to False (im2col fallback) if the direct kernel
                       # ever fails to lower on the current backend.


def conv3x3_s1_bn_act(x, prep, relu):
    """3x3 / stride 1 / pad 1 conv + folded BN (+ReLU) without HBM im2col."""
    global _DIRECT_3X3_OK
    n, h, w, cin = x.shape
    hp, wp = h + 2, w + 2
    kp = _round_up(cin, 128)
    np_ = prep['w3'].shape[1]
    cout = prep['cout']
    m = n * hp * wp
    tm, mp = _pick_m(m)
    tk = kp
    tn = _pick_n(np_)
    sh = _round_up(2 * wp + 2, 8)          # max tap shift, sublane-rounded
    if (not _DIRECT_3X3_OK) or sh > tm or kp > 512:
        return conv_im2col_bn_act(x, prep, relu)

    # Flatten the zero-padded activation once; tap (ki, kj) is a constant row
    # shift of ki*Wp + kj in this flat view.  Outputs are computed for every
    # padded position and the valid (H, W) window is sliced out afterwards.
    xpad = jnp.pad(x, ((0, 0), (1, 1), (1, 1), (0, 0)))
    xf = xpad.reshape(m, cin).astype(jnp.float32)
    xf = jnp.pad(xf, ((0, mp + tm - m), (0, kp - cin)))
    shifts = tuple(ki * wp + kj for ki in range(3) for kj in range(3))

    block_bytes = 2 * tm * tk * 4 + 9 * tk * tn * 2 + 2 * tn * 4 + tm * tn * 4
    scratch_bytes = (tm + sh) * tk * 4 + tm * 9 * tk * 2
    try:
        out = pl.pallas_call(
            functools.partial(_conv3x3_kernel, shifts=shifts, sh=sh,
                              tm=tm, tk=tk, relu=relu),
            out_shape=jax.ShapeDtypeStruct((mp, np_), jnp.float32),
            grid_spec=pltpu.PrefetchScalarGridSpec(
                num_scalar_prefetch=0,
                grid=(mp // tm, np_ // tn),
                in_specs=[
                    pl.BlockSpec((tm, tk), lambda i, j: (i, 0)),
                    pl.BlockSpec((tm, tk), lambda i, j: (i + 1, 0)),
                    pl.BlockSpec((9 * tk, tn), lambda i, j: (0, j)),
                    pl.BlockSpec((1, tn), lambda i, j: (0, j)),
                    pl.BlockSpec((1, tn), lambda i, j: (0, j)),
                ],
                out_specs=pl.BlockSpec((tm, tn), lambda i, j: (i, j)),
                scratch_shapes=[pltpu.VMEM((tm + sh, tk), jnp.float32),
                                pltpu.VMEM((tm, 9 * tk), jnp.bfloat16)],
            ),
            compiler_params=pltpu.CompilerParams(
                dimension_semantics=("parallel", "parallel"),
                vmem_limit_bytes=_vmem_limit(block_bytes, scratch_bytes),
            ),
        )(xf, xf, prep['w3'], prep['scale'], prep['bias'])
    except Exception:  # robustness fallback: never fail the forward pass
        _DIRECT_3X3_OK = False
        return conv_im2col_bn_act(x, prep, relu)
    out = out[:m, :cout].reshape(n, hp, wp, cout)
    return out[:, :h, :w, :]


def conv_bn_act(x, prep, relu, residual=None):
    """Dispatch: 1x1 -> plain matmul, 3x3/s1 -> direct kernel, else im2col."""
    kh, kw, stride = prep['kh'], prep['kw'], prep['stride']
    if kh == 1 and kw == 1:
        if stride > 1:
            x = x[:, ::stride, ::stride, :]
        n, h, w, c = x.shape
        res2d = residual.reshape(n * h * w, -1) if residual is not None else None
        out = matmul_bn_act(x.reshape(n * h * w, c), prep, relu, residual=res2d)
        return out.reshape(n, h, w, prep['cout'])
    if (kh == 3 and kw == 3 and stride == 1 and prep['padding'] == 1
            and residual is None):
        return conv3x3_s1_bn_act(x, prep, relu)
    return conv_im2col_bn_act(x, prep, relu, residual)


def maxpool_3x3_s2_p1(x):
    """nn.MaxPool2d(kernel_size=3, stride=2, padding=1), NHWC, row-tiled."""
    n, h, w, c = x.shape
    ho = (h + 2 - 3) // 2 + 1
    wo = (w + 2 - 3) // 2 + 1
    xp = jnp.pad(x, ((0, 0), (1, 1), (1, 1), (0, 0)), constant_values=-jnp.inf)
    patches = [xp[:, ki:ki + 2 * ho:2, kj:kj + 2 * wo:2, :]
               for ki in range(3) for kj in range(3)]
    m = n * ho * wo
    cp = _round_up(c, 128)
    tmr = 512 if m > 512 else _round_up(max(m, 8), 8)
    mp = _round_up(m, tmr)
    stk = jnp.stack(patches, axis=0).reshape(9, m, c)
    if mp != m or cp != c:
        stk = jnp.pad(stk, ((0, 0), (0, mp - m), (0, cp - c)),
                      constant_values=-jnp.inf)
    out = pl.pallas_call(
        _maxpool_kernel,
        out_shape=jax.ShapeDtypeStruct((mp, cp), jnp.float32),
        grid_spec=pltpu.PrefetchScalarGridSpec(
            num_scalar_prefetch=0,
            grid=(mp // tmr,),
            in_specs=[pl.BlockSpec((9, tmr, cp), lambda i: (0, i, 0))],
            out_specs=pl.BlockSpec((tmr, cp), lambda i: (i, 0)),
        ),
        compiler_params=pltpu.CompilerParams(
            dimension_semantics=("parallel",)),
    )(stk)
    return out[:m, :c].reshape(n, ho, wo, c)


def global_avgpool(x):
    """AdaptiveAvgPool2d((1,1)) + flatten: NHWC -> (N, C), tiled over N and C."""
    n, h, w, c = x.shape
    hw = h * w
    tb = 32 if n > 32 else _round_up(max(n, 8), 8)
    nb = _round_up(n, tb)
    hwp = _round_up(max(hw, 8), 8)
    cp = _round_up(c, 128)
    tc = _pick_n(cp)
    xr = x.reshape(n, hw, c).astype(jnp.float32)
    xr = jnp.pad(xr, ((0, nb - n), (0, hwp - hw), (0, cp - c)))
    out = pl.pallas_call(
        functools.partial(_avgpool_kernel, inv_hw=1.0 / hw),
        out_shape=jax.ShapeDtypeStruct((nb, cp), jnp.float32),
        grid_spec=pltpu.PrefetchScalarGridSpec(
            num_scalar_prefetch=0,
            grid=(nb // tb, cp // tc),
            in_specs=[pl.BlockSpec((tb, hwp, tc), lambda i, j: (i, 0, j))],
            out_specs=pl.BlockSpec((tb, tc), lambda i, j: (i, j)),
        ),
        compiler_params=pltpu.CompilerParams(
            dimension_semantics=("parallel", "parallel")),
    )(xr)
    return out[:n, :c]


# ----------------------------- parameters ------------------------------------

def _conv_w(key, cout, cin, kh, kw):
    std = (2.0 / (cin * kh * kw)) ** 0.5
    return std * jax.random.normal(key, (cout, cin, kh, kw), dtype=jnp.float32)


def _bn_p(key, c):
    k1, k2, k3, k4 = jax.random.split(key, 4)
    return dict(
        gamma=1.0 + 0.02 * jax.random.normal(k1, (c,), jnp.float32),
        beta=0.02 * jax.random.normal(k2, (c,), jnp.float32),
        mean=0.1 * jax.random.normal(k3, (c,), jnp.float32),
        var=1.0 + 0.1 * jnp.abs(jax.random.normal(k4, (c,), jnp.float32)),
    )


def init_resnet50_params(key):
    """Deterministic synthetic weights with the exact ResNet50 shapes
    (conv1 modified to 1 input channel, fc modified to 1 output)."""
    keys = iter(jax.random.split(key, 256))
    nk = lambda: next(keys)
    params = {}
    params['conv1'] = _conv_w(nk(), 64, 1, 7, 7)
    params['bn1'] = _bn_p(nk(), 64)
    layer_cfg = [('layer1', 64, 3, 1), ('layer2', 128, 4, 2),
                 ('layer3', 256, 6, 2), ('layer4', 512, 3, 2)]
    inplanes = 64
    for name, planes, blocks, stride in layer_cfg:
        blks = []
        for b in range(blocks):
            s = stride if b == 0 else 1
            blk = {'stride': s}
            blk['conv1'] = _conv_w(nk(), planes, inplanes, 1, 1)
            blk['bn1'] = _bn_p(nk(), planes)
            blk['conv2'] = _conv_w(nk(), planes, planes, 3, 3)
            blk['bn2'] = _bn_p(nk(), planes)
            blk['conv3'] = _conv_w(nk(), planes * 4, planes, 1, 1)
            blk['bn3'] = _bn_p(nk(), planes * 4)
            if s != 1 or inplanes != planes * 4:
                blk['down_conv'] = _conv_w(nk(), planes * 4, inplanes, 1, 1)
                blk['down_bn'] = _bn_p(nk(), planes * 4)
            blks.append(blk)
            inplanes = planes * 4
        params[name] = blks
    params['fc_w'] = 0.02 * jax.random.normal(nk(), (1, 2048), jnp.float32)
    params['fc_b'] = jnp.zeros((1,), jnp.float32)
    return params


def _prepare_conv(w, bn, stride, padding):
    """Fold BN (running stats) into scale/bias and pre-reshape/pad/cast the
    conv weight once at init (no per-forward weight work)."""
    cout, cin, kh, kw = w.shape
    scale = bn['gamma'] / jnp.sqrt(bn['var'] + EPS)
    bias = bn['beta'] - bn['mean'] * scale
    npad = _round_up(cout, 128)
    prep = dict(
        kh=kh, kw=kw, stride=stride, padding=padding, cin=cin, cout=cout,
        scale=jnp.pad(scale, (0, npad - cout)).reshape(1, npad).astype(jnp.float32),
        bias=jnp.pad(bias, (0, npad - cout)).reshape(1, npad).astype(jnp.float32),
    )
    # im2col layout: (KH*KW*Cin, Cout), K padded to a lane multiple, bf16.
    kfull = kh * kw * cin
    kpad = _round_up(kfull, 128)
    w2d = jnp.transpose(w, (2, 3, 1, 0)).reshape(kfull, cout)
    prep['w'] = jnp.pad(w2d, ((0, kpad - kfull), (0, npad - cout))).astype(jnp.bfloat16)
    if kh == 3 and kw == 3:
        # per-tap layout for the direct 3x3 kernel: (9*Cin_pad, Cout_pad), bf16.
        cinp = _round_up(cin, 128)
        taps = [jnp.pad(w[:, :, ki, kj].T, ((0, cinp - cin), (0, npad - cout)))
                for ki in range(3) for kj in range(3)]
        prep['w3'] = jnp.concatenate(taps, axis=0).astype(jnp.bfloat16)
    return prep


def _prepare_fc(fc_w, fc_b):
    cout, cin = fc_w.shape
    npad = _round_up(cout, 128)
    kpad = _round_up(cin, 128)
    return dict(
        kh=1, kw=1, stride=1, padding=0, cin=cin, cout=cout,
        w=jnp.pad(fc_w.T, ((0, kpad - cin), (0, npad - cout))).astype(jnp.bfloat16),
        scale=jnp.pad(jnp.ones((cout,), jnp.float32), (0, npad - cout)).reshape(1, npad),
        bias=jnp.pad(fc_b.astype(jnp.float32), (0, npad - cout)).reshape(1, npad),
    )


def prepare_resnet50_params(raw):
    prep = {'conv1': _prepare_conv(raw['conv1'], raw['bn1'], stride=2, padding=3)}
    for name in ('layer1', 'layer2', 'layer3', 'layer4'):
        blocks = []
        for blk in raw[name]:
            s = blk['stride']
            b = {
                'conv1': _prepare_conv(blk['conv1'], blk['bn1'], 1, 0),
                'conv2': _prepare_conv(blk['conv2'], blk['bn2'], s, 1),
                'conv3': _prepare_conv(blk['conv3'], blk['bn3'], 1, 0),
            }
            if 'down_conv' in blk:
                b['down'] = _prepare_conv(blk['down_conv'], blk['down_bn'], s, 0)
            blocks.append(b)
        prep[name] = blocks
    prep['fc'] = _prepare_fc(raw['fc_w'], raw['fc_b'])
    return prep


# ----------------------------- forward pass -----------------------------------

def bottleneck_forward(x, p):
    out = conv_bn_act(x, p['conv1'], relu=True)
    out = conv_bn_act(out, p['conv2'], relu=True)
    if 'down' in p:
        identity = conv_bn_act(x, p['down'], relu=False)
    else:
        identity = x
    # conv3 + BN + residual add + ReLU fused into one matmul epilogue.
    return conv_bn_act(out, p['conv3'], relu=True, residual=identity)


def resnet50_forward(params, x):
    """x: (N, H, W)  (torch forward does x.unsqueeze(1) to get NCHW, C=1)."""
    x = x[..., None].astype(jnp.float32)                    # NHWC, C = 1
    x = conv_bn_act(x, params['conv1'], relu=True)          # 7x7 / s2 / p3
    x = maxpool_3x3_s2_p1(x)
    for name in ('layer1', 'layer2', 'layer3', 'layer4'):
        for blk in params[name]:
            x = bottleneck_forward(x, blk)
    x = global_avgpool(x)                                   # (N, 2048)
    logits = matmul_bn_act(x, params['fc'], relu=False)     # (N, 1)
    # TODO(synk): BCEWithLogitsLoss / sigmoid threshold / training loop are not
    # part of forward() and are intentionally not implemented.
    return logits


if __name__ == "__main__":
    key = jax.random.PRNGKey(0)
    pk, xk = jax.random.split(key)
    raw_params = init_resnet50_params(pk)
    params = prepare_resnet50_params(raw_params)
    x = jax.random.normal(xk, (2, 16, 16), dtype=jnp.float32)   # (N, H, W)
    out = resnet50_forward(params, x)
    out = jax.block_until_ready(out)
    assert out.shape == (2, 1), out.shape
    assert bool(jnp.all(jnp.isfinite(out)))
    print("KERNEL_OK")
</pallas_src>

<mosaic_0001>
module attributes {stable_mosaic.version = 11 : i64} {
  func.func @_mm_kernel(%arg0: i32, %arg1: i32, %arg2: i32, %arg3: memref<128x128xbf16, #tpu.memory_space<vmem>>, %arg4: memref<128x128xbf16, #tpu.memory_space<vmem>>, %arg5: memref<1x128xf32, #tpu.memory_space<vmem>>, %arg6: memref<1x128xf32, #tpu.memory_space<vmem>>, %arg7: memref<128x128xf32, #tpu.memory_space<vmem>>, %arg8: memref<128x128xf32, #tpu.memory_space<vmem>>) attributes {dimension_semantics = [#tpu.dimension_semantics<parallel>, #tpu.dimension_semantics<parallel>, #tpu.dimension_semantics<arbitrary>], iteration_bounds = array<i64: 1, 1, 1>, scalar_prefetch = 0 : i64, scratch_operands = 1 : i64, tpu.core_type = #tpu.core_type<tc>, window_params = [{transform_indices = @transform_0, window_bounds = array<i64: 128, 128>}, {transform_indices = @transform_1, window_bounds = array<i64: 128, 128>}, {transform_indices = @transform_2, window_bounds = array<i64: 1, 128>}, {transform_indices = @transform_3, window_bounds = array<i64: 1, 128>}, {transform_indices = @transform_4, window_bounds = array<i64: 128, 128>}]} {
    %c0_i32 = arith.constant 0 : i32
    %0 = arith.cmpi eq, %arg2, %c0_i32 : i32
    %1 = arith.extui %0 : i1 to i32
    %c0_i32_0 = arith.constant 0 : i32
    %2 = arith.cmpi ne, %1, %c0_i32_0 : i32
    scf.if %2 {
      %cst_10 = arith.constant 0.000000e+00 : f32
      %12 = vector.broadcast %cst_10 : f32 to vector<128x128xf32>
      %c0_11 = arith.constant 0 : index
      %c0_12 = arith.constant 0 : index
      %13 = vector.load %arg8[%c0_11, %c0_12] : memref<128x128xf32, #tpu.memory_space<vmem>>, vector<128x128xf32>
      tpu.vector_store %arg8[%c0_11, %c0_12], %12 {strides = array<i32>} : memref<128x128xf32, #tpu.memory_space<vmem>>, vector<128x128xf32>,
    } else {
    }
    %c0 = arith.constant 0 : index
    %c0_1 = arith.constant 0 : index
    %3 = vector.load %arg8[%c0, %c0_1] : memref<128x128xf32, #tpu.memory_space<vmem>>, vector<128x128xf32>
    %c0_2 = arith.constant 0 : index
    %c0_3 = arith.constant 0 : index
    %4 = vector.load %arg3[%c0_2, %c0_3] : memref<128x128xbf16, #tpu.memory_space<vmem>>, vector<128x128xbf16>
    %c0_4 = arith.constant 0 : index
    %c0_5 = arith.constant 0 : index
    %5 = vector.load %arg4[%c0_4, %c0_5] : memref<128x128xbf16, #tpu.memory_space<vmem>>, vector<128x128xbf16>
    %cst = arith.constant dense<0.000000e+00> : vector<128x128xf32>
    %6 = tpu.matmul %4, %5, %cst {dimension_numbers = #tpu.dot_dimension_numbers<[1], [0], [0], [1], [0, 0, 1, 1], [], []>} : vector<128x128xbf16>, vector<128x128xbf16>, vector<128x128xf32> -> vector<128x128xf32>
    %7 = arith.addf %3, %6 : vector<128x128xf32>
    %c0_6 = arith.constant 0 : index
    %c0_7 = arith.constant 0 : index
    %8 = vector.load %arg8[%c0_6, %c0_7] : memref<128x128xf32, #tpu.memory_space<vmem>>, vector<128x128xf32>
    tpu.vector_store %arg8[%c0_6, %c0_7], %7 {strides = array<i32>} : memref<128x128xf32, #tpu.memory_space<vmem>>, vector<128x128xf32>,
    %c0_i32_8 = arith.constant 0 : i32
    %9 = arith.cmpi eq, %arg2, %c0_i32_8 : i32
    %10 = arith.extui %9 : i1 to i32
    %c0_i32_9 = arith.constant 0 : i32
    %11 = arith.cmpi ne, %10, %c0_i32_9 : i32
    scf.if %11 {
      %c0_10 = arith.constant 0 : index
      %c0_11 = arith.constant 0 : index
      %12 = vector.load %arg8[%c0_10, %c0_11] : memref<128x128xf32, #tpu.memory_space<vmem>>, vector<128x128xf32>
      %c0_12 = arith.constant 0 : index
      %c0_13 = arith.constant 0 : index
      %13 = vector.load %arg5[%c0_12, %c0_13] : memref<1x128xf32, #tpu.memory_space<vmem>>, vector<1x128xf32>
      %14 = vector.broadcast %13 : vector<1x128xf32> to vector<128x128xf32>
      %15 = arith.mulf %12, %14 : vector<128x128xf32>
      %c0_14 = arith.constant 0 : index
      %c0_15 = arith.constant 0 : index
      %16 = vector.load %arg6[%c0_14, %c0_15] : memref<1x128xf32, #tpu.memory_space<vmem>>, vector<1x128xf32>
      %17 = vector.broadcast %16 : vector<1x128xf32> to vector<128x128xf32>
      %18 = arith.addf %15, %17 : vector<128x128xf32>
      %cst_16 = arith.constant 0.000000e+00 : f32
      %19 = vector.broadcast %cst_16 : f32 to vector<128x128xf32>
      %20 = arith.maximumf %18, %19 : vector<128x128xf32>
      %c0_17 = arith.constant 0 : index
      %c0_18 = arith.constant 0 : index
      %21 = vector.load %arg7[%c0_17, %c0_18] : memref<128x128xf32, #tpu.memory_space<vmem>>, vector<128x128xf32>
      tpu.vector_store %arg7[%c0_17, %c0_18], %20 {strides = array<i32>} : memref<128x128xf32, #tpu.memory_space<vmem>>, vector<128x128xf32>,
    } else {
    }
    return
  }
  func.func @transform_0(%arg0: i32, %arg1: i32, %arg2: i32) -> (i32, i32) {
    %c0_i32 = arith.constant 0 : i32
    return %arg0, %arg2 : i32, i32
  }
  func.func @transform_1(%arg0: i32, %arg1: i32, %arg2: i32) -> (i32, i32) {
    %c0_i32 = arith.constant 0 : i32
    return %arg2, %arg1 : i32, i32
  }
  func.func @transform_2(%arg0: i32, %arg1: i32, %arg2: i32) -> (i32, i32) {
    %c0_i32 = arith.constant 0 : i32
    %c0_i32_0 = arith.constant 0 : i32
    return %c0_i32, %arg1 : i32, i32
  }
  func.func @transform_3(%arg0: i32, %arg1: i32, %arg2: i32) -> (i32, i32) {
    %c0_i32 = arith.constant 0 : i32
    %c0_i32_0 = arith.constant 0 : i32
    return %c0_i32, %arg1 : i32, i32
  }
  func.func @transform_4(%arg0: i32, %arg1: i32, %arg2: i32) -> (i32, i32) {
    %c0_i32 = arith.constant 0 : i32
    return %arg0, %arg1 : i32, i32
  }
}

</mosaic_0001>

<llo_original>
// kernel: tpu_custom_call.1
$region0: #{tpu_custom_call.1}
  #allocation0 [shape = 'u32[]', space=smem, size = 0x4, offset = 0x4, fixed_abs, tag = 'smem constant byte address 0x4 - core index']
  #allocation1 [shape = 'u32[144,128]{1,0:T(1,128)}', space=vmem, size = 0x12000, scoped, tag = 'internal scratch']
  #allocation2 [shape = 'f32[128,128]{1,0:T(8,128)}', space=vmem, size = 0x10000, scoped, tag = 'scratch operand']
  %s0 = inlined_call_operand.hbm [shape: bf16[128,128], index: 0, kind: input, shape index: {}]
  %s1 = inlined_call_operand.hbm [shape: bf16[128,128], index: 1, kind: input, shape index: {}]
  %s2 = inlined_call_operand.vmem [shape: f32[1,128], index: 2, kind: input, shape index: {}]
  %s3 = inlined_call_operand.vmem [shape: f32[1,128], index: 3, kind: input, shape index: {}]
  %s4 = inlined_call_operand.hbm [shape: f32[128,128], index: 4, kind: output, shape index: {}]
  %s5 = sld [smem:[#allocation0]]
  $region42: #{tpu_custom_call.1} parent=0
    _
  %s7 = ssub.s32 1, %s5
  %s8 = scalar_select 0, %s7, %s5
  $region1: #{tpu_custom_call.1} parent=0
    #allocation3 [shape = 'u8[32768]{0}', space=vmem, size = 0x8000, scoped, tag = 'input window, operand 0, single buffered']
    #allocation4 [shape = 's32[1]{0}', space=sflag, size = 0x4, scoped, tag = 'scoped memory for tpu_custom_call.1']
    #allocation5 [shape = 's32[1]{0}', space=sflag, size = 0x4, scoped, tag = 'scoped memory for tpu_custom_call.1']
    #allocation6 [shape = 'u8[32768]{0}', space=vmem, size = 0x8000, scoped, tag = 'input window, operand 1, single buffered']
    #allocation7 [shape = 's32[1]{0}', space=sflag, size = 0x4, scoped, tag = 'scoped memory for tpu_custom_call.1']
    #allocation8 [shape = 'u8[65536]{0}', space=vmem, size = 0x10000, scoped, tag = 'output window, operand 0, single buffered']
    %9 = vsyncpa [#allocation4], 0
    %10 = vsyncpa [#allocation7], 0
    %11 = vsyncpa [#allocation5], 0
    // Predicated region
    $region2: #{tpu_custom_call.1} parent=1 // pred_check
      _
    $region3: #{tpu_custom_call.1} parent=1 // pred_check_branch
      %13 = sbr.rel (0) target = $region5
    $region4: #{tpu_custom_call.1} parent=1 // pred_region
      %s15 = ssub.s32 1024, 1024
      %16 = vsyncadd [#allocation4], %s15
      %s17 = sshll.u32 [#allocation3], 4
      %s18 = int_to_ptr.vmem [resolvable:$true] %s17
      %23 = dma.hbm_to_vmem [thread:$0]  %s0, 1024, %s18, [#allocation4], 64, 64, 4
    $region5: #{tpu_custom_call.1} parent=1 // pred_fallthru
      _
    // Predicated region
    $region6: #{tpu_custom_call.1} parent=1 // pred_check
      _
    $region7: #{tpu_custom_call.1} parent=1 // pred_check_branch
      %25 = sbr.rel (0) target = $region9
    $region8: #{tpu_custom_call.1} parent=1 // pred_region
      %s27 = ssub.s32 1024, 1024
      %28 = vsyncadd [#allocation7], %s27
      %s29 = sshll.u32 [#allocation6], 4
      %s30 = int_to_ptr.vmem [resolvable:$true] %s29
      %35 = dma.hbm_to_vmem [thread:$0]  %s1, 1024, %s30, [#allocation7], 64, 64, 4
    $region9: #{tpu_custom_call.1} parent=1 // pred_fallthru
      _
    // Predicated region
    $region10: #{tpu_custom_call.1} parent=1 // pred_check
      _
    $region11: #{tpu_custom_call.1} parent=1 // pred_check_branch
      %37 = sbr.rel (0) target = $region13
    $region12: #{tpu_custom_call.1} parent=1 // pred_region
      _
    $region13: #{tpu_custom_call.1} parent=1 // pred_fallthru
      _
    // Predicated region
    $region14: #{tpu_custom_call.1} parent=1 // pred_check
      _
    $region15: #{tpu_custom_call.1} parent=1 // pred_check_branch
      %39 = sbr.rel (0) target = $region17
    $region16: #{tpu_custom_call.1} parent=1 // pred_region
      _
    $region17: #{tpu_custom_call.1} parent=1 // pred_fallthru
      _
    // Predicated region
    $region18: #{tpu_custom_call.1} parent=1 // pred_check
      _
    $region19: #{tpu_custom_call.1} parent=1 // pred_check_branch
      %41 = sbr.rel (0) target = $region21
    $region20: #{tpu_custom_call.1} parent=1 // pred_region
      %42 = dma.done [#allocation4], 1024
    $region21: #{tpu_custom_call.1} parent=1 // pred_fallthru
      _
    // Predicated region
    $region22: #{tpu_custom_call.1} parent=1 // pred_check
      _
    $region23: #{tpu_custom_call.1} parent=1 // pred_check_branch
      %44 = sbr.rel (0) target = $region25
    $region24: #{tpu_custom_call.1} parent=1 // pred_region
      %45 = dma.done [#allocation7], 1024
    $region25: #{tpu_custom_call.1} parent=1 // pred_fallthru
      _
    %p47 = scmp.eq.s32.totalorder 0, 0
    // Predicated region
    $region26: #{tpu_custom_call.1} parent=1 // pred_check
      %p48 = pneg %p47
    $region27: #{tpu_custom_call.1} parent=1 // pred_check_branch
      %50 = sbr.rel (%p48) target = $region29
    $region28: #{tpu_custom_call.1} parent=1 // pred_region
      %51 = vst [vmem:[#allocation2] sm:$0xff] 0.0
      %52 = vst [vmem:[#allocation2 + $0x8] sm:$0xff] 0.0
      %53 = vst [vmem:[#allocation2 + $0x10] sm:$0xff] 0.0
      %54 = vst [vmem:[#allocation2 + $0x18] sm:$0xff] 0.0
      %55 = vst [vmem:[#allocation2 + $0x20] sm:$0xff] 0.0
      %56 = vst [vmem:[#allocation2 + $0x28] sm:$0xff] 0.0
      %57 = vst [vmem:[#allocation2 + $0x30] sm:$0xff] 0.0
      %58 = vst [vmem:[#allocation2 + $0x38] sm:$0xff] 0.0
      %59 = vst [vmem:[#allocation2 + $0x40] sm:$0xff] 0.0
      %60 = vst [vmem:[#allocation2 + $0x48] sm:$0xff] 0.0
      %61 = vst [vmem:[#allocation2 + $0x50] sm:$0xff] 0.0
      %62 = vst [vmem:[#allocation2 + $0x58] sm:$0xff] 0.0
      %63 = vst [vmem:[#allocation2 + $0x60] sm:$0xff] 0.0
      %64 = vst [vmem:[#allocation2 + $0x68] sm:$0xff] 0.0
      %65 = vst [vmem:[#allocation2 + $0x70] sm:$0xff] 0.0
      %66 = vst [vmem:[#allocation2 + $0x78] sm:$0xff] 0.0
    $region29: #{tpu_custom_call.1} parent=1 // pred_fallthru
      _
    %v67 = vld [vmem:[#allocation2] sm:$0xff]
    %v68 = vld [vmem:[#allocation2 + $0x8] sm:$0xff]
    %v69 = vld [vmem:[#allocation2 + $0x10] sm:$0xff]
    %v70 = vld [vmem:[#allocation2 + $0x18] sm:$0xff]
    %v71 = vld [vmem:[#allocation2 + $0x20] sm:$0xff]
    %v72 = vld [vmem:[#allocation2 + $0x28] sm:$0xff]
    %v73 = vld [vmem:[#allocation2 + $0x30] sm:$0xff]
    %v74 = vld [vmem:[#allocation2 + $0x38] sm:$0xff]
    %v75 = vld [vmem:[#allocation2 + $0x40] sm:$0xff]
    %v76 = vld [vmem:[#allocation2 + $0x48] sm:$0xff]
    %v77 = vld [vmem:[#allocation2 + $0x50] sm:$0xff]
    %v78 = vld [vmem:[#allocation2 + $0x58] sm:$0xff]
    %v79 = vld [vmem:[#allocation2 + $0x60] sm:$0xff]
    %v80 = vld [vmem:[#allocation2 + $0x68] sm:$0xff]
    %v81 = vld [vmem:[#allocation2 + $0x70] sm:$0xff]
    %v82 = vld [vmem:[#allocation2 + $0x78] sm:$0xff]
    %v83 = vld [vmem:[#allocation3] sm:$0xf]
    %v84 = vld [vmem:[#allocation3 + $0x4] sm:$0xf]
    %v85 = vld [vmem:[#allocation3 + $0x8] sm:$0xf]
    %v86 = vld [vmem:[#allocation3 + $0xc] sm:$0xf]
    %v87 = vld [vmem:[#allocation3 + $0x10] sm:$0xf]
    %v88 = vld [vmem:[#allocation3 + $0x14] sm:$0xf]
    %v89 = vld [vmem:[#allocation3 + $0x18] sm:$0xf]
    %v90 = vld [vmem:[#allocation3 + $0x1c] sm:$0xf]
    %v91 = vld [vmem:[#allocation3 + $0x20] sm:$0xf]
    %v92 = vld [vmem:[#allocation3 + $0x24] sm:$0xf]
    %v93 = vld [vmem:[#allocation3 + $0x28] sm:$0xf]
    %v94 = vld [vmem:[#allocation3 + $0x2c] sm:$0xf]
    %v95 = vld [vmem:[#allocation3 + $0x30] sm:$0xf]
    %v96 = vld [vmem:[#allocation3 + $0x34] sm:$0xf]
    %v97 = vld [vmem:[#allocation3 + $0x38] sm:$0xf]
    %v98 = vld [vmem:[#allocation3 + $0x3c] sm:$0xf]
    %v99 = vld [vmem:[#allocation6] sm:$0xf]
    %v100 = vld [vmem:[#allocation6 + $0x4] sm:$0xf]
    %v101 = vld [vmem:[#allocation6 + $0x8] sm:$0xf]
    %v102 = vld [vmem:[#allocation6 + $0xc] sm:$0xf]
    %v103 = vld [vmem:[#allocation6 + $0x10] sm:$0xf]
    %v104 = vld [vmem:[#allocation6 + $0x14] sm:$0xf]
    %v105 = vld [vmem:[#allocation6 + $0x18] sm:$0xf]
    %v106 = vld [vmem:[#allocation6 + $0x1c] sm:$0xf]
    %v107 = vld [vmem:[#allocation6 + $0x20] sm:$0xf]
    %v108 = vld [vmem:[#allocation6 + $0x24] sm:$0xf]
    %v109 = vld [vmem:[#allocation6 + $0x28] sm:$0xf]
    %v110 = vld [vmem:[#allocation6 + $0x2c] sm:$0xf]
    %v111 = vld [vmem:[#allocation6 + $0x30] sm:$0xf]
    %v112 = vld [vmem:[#allocation6 + $0x34] sm:$0xf]
    %v113 = vld [vmem:[#allocation6 + $0x38] sm:$0xf]
    %v114 = vld [vmem:[#allocation6 + $0x3c] sm:$0xf]
    %v131 = vunpack.c.l.b16 %v83
    %v132 = vunpack.c.l.b16 %v84
    %v133 = vunpack.c.l.b16 %v85
    %v134 = vunpack.c.l.b16 %v86
    %v135 = vunpack.c.l.b16 %v87
    %v136 = vunpack.c.l.b16 %v88
    %v137 = vunpack.c.l.b16 %v89
    %v138 = vunpack.c.l.b16 %v90
    %v139 = vunpack.c.l.b16 %v91
    %v140 = vunpack.c.l.b16 %v92
    %v141 = vunpack.c.l.b16 %v93
    %v142 = vunpack.c.l.b16 %v94
    %v143 = vunpack.c.l.b16 %v95
    %v144 = vunpack.c.l.b16 %v96
    %v145 = vunpack.c.l.b16 %v97
    %v146 = vunpack.c.l.b16 %v98
    %v147 = vpack.c.b16 %v132, %v131
    %v148 = vpack.c.b16 %v134, %v133
    %v149 = vpack.c.b16 %v136, %v135
    %v150 = vpack.c.b16 %v138, %v137
    %v151 = vpack.c.b16 %v140, %v139
    %v152 = vpack.c.b16 %v142, %v141
    %v153 = vpack.c.b16 %v144, %v143
    %v154 = vpack.c.b16 %v146, %v145
    %v179 = vunpack.c.l.b16 %v99
    %v180 = vunpack.c.l.b16 %v100
    %v181 = vunpack.c.l.b16 %v101
    %v182 = vunpack.c.l.b16 %v102
    %v183 = vunpack.c.l.b16 %v103
    %v184 = vunpack.c.l.b16 %v104
    %v185 = vunpack.c.l.b16 %v105
    %v186 = vunpack.c.l.b16 %v106
    %v187 = vunpack.c.l.b16 %v107
    %v188 = vunpack.c.l.b16 %v108
    %v189 = vunpack.c.l.b16 %v109
    %v190 = vunpack.c.l.b16 %v110
    %v191 = vunpack.c.l.b16 %v111
    %v192 = vunpack.c.l.b16 %v112
    %v193 = vunpack.c.l.b16 %v113
    %v194 = vunpack.c.l.b16 %v114
    %v195 = vpack.c.b16 %v180, %v179
    %v196 = vpack.c.b16 %v182, %v181
    %v197 = vpack.c.b16 %v184, %v183
    %v198 = vpack.c.b16 %v186, %v185
    %v199 = vpack.c.b16 %v188, %v187
    %v200 = vpack.c.b16 %v190, %v189
    %v201 = vpack.c.b16 %v192, %v191
    %v202 = vpack.c.b16 %v194, %v193
    %211 = vmatprep.subr.bf16.mxu0 0
    %212 = vmatpush1.bf16.msra.mxu0 %v195
    %213 = vmatprep.subr.bf16.mxu0 0
    %214 = vmatpush1.bf16.msra.mxu0 %v196
    %215 = vmatprep.subr.bf16.mxu0 0
    %216 = vmatpush1.bf16.msra.mxu0 %v197
    %217 = vmatprep.subr.bf16.mxu0 0
    %218 = vmatpush1.bf16.msra.mxu0 %v198
    %219 = vmatprep.subr.bf16.mxu0 0
    %220 = vmatpush1.bf16.msra.mxu0 %v199
    %221 = vmatprep.subr.bf16.mxu0 0
    %222 = vmatpush1.bf16.msra.mxu0 %v200
    %223 = vmatprep.subr.bf16.mxu0 0
    %224 = vmatpush1.bf16.msra.mxu0 %v201
    %225 = vmatprep.subr.bf16.mxu0 0
    %226 = vmatpush1.bf16.msra.mxu0 %v202
    %227 = vmatprep.subr.bf16.mxu0 0
    %228 = vmatpush1.bf16.msra.mxu0 0
    %229 = vmatprep.subr.bf16.mxu0 0
    %230 = vmatpush1.bf16.msra.mxu0 0
    %231 = vmatprep.subr.bf16.mxu0 0
    %232 = vmatpush1.bf16.msra.mxu0 0
    %233 = vmatprep.subr.bf16.mxu0 0
    %234 = vmatpush1.bf16.msra.mxu0 0
    %235 = vmatprep.subr.bf16.mxu0 0
    %236 = vmatpush1.bf16.msra.mxu0 0
    %237 = vmatprep.subr.bf16.mxu0 0
    %238 = vmatpush1.bf16.msra.mxu0 0
    %239 = vmatprep.subr.bf16.mxu0 0
    %240 = vmatpush1.bf16.msra.mxu0 0
    %241 = vmatprep.subr.bf16.mxu0 0
    %242 = vmatpush1.bf16.msra.mxu0 0
    %243 = vmatprep.mubr.bf16.mxu0 0
    %244 = vmatmul.mubr.bf16.gmra.mrb[0].mxu0 %v147
    %v245 = vpop.f32.mrb[0].mxu0
    %v246 = vadd.f32 0.0, %v245
    %v247 = vpop.f32.mrb[0].mxu0
    %v248 = vpop.f32.mrb[0].mxu0
    %v249 = vadd.f32 0.0, %v248
    %v250 = vpop.f32.mrb[0].mxu0
    %251 = vmatprep.mubr.bf16.mxu0 0
    %252 = vmatmul.mubr.bf16.gmra.mrb[0].mxu0 %v148
    %v253 = vpop.f32.mrb[0].mxu0
    %v254 = vadd.f32 0.0, %v253
    %v255 = vpop.f32.mrb[0].mxu0
    %v256 = vpop.f32.mrb[0].mxu0
    %v257 = vadd.f32 0.0, %v256
    %v258 = vpop.f32.mrb[0].mxu0
    %259 = vmatprep.mubr.bf16.mxu0 0
    %260 = vmatmul.mubr.bf16.gmra.mrb[0].mxu0 %v149
    %v261 = vpop.f32.mrb[0].mxu0
    %v262 = vadd.f32 0.0, %v261
    %v263 = vpop.f32.mrb[0].mxu0
    %v264 = vpop.f32.mrb[0].mxu0
    %v265 = vadd.f32 0.0, %v264
    %v266 = vpop.f32.mrb[0].mxu0
    %267 = vmatprep.mubr.bf16.mxu0 0
    %268 = vmatmul.mubr.bf16.gmra.mrb[0].mxu0 %v150
    %v269 = vpop.f32.mrb[0].mxu0
    %v270 = vadd.f32 0.0, %v269
    %v271 = vpop.f32.mrb[0].mxu0
    %v272 = vpop.f32.mrb[0].mxu0
    %v273 = vadd.f32 0.0, %v272
    %v274 = vpop.f32.mrb[0].mxu0
    %275 = vmatprep.mubr.bf16.mxu0 0
    %276 = vmatmul.mubr.bf16.gmra.mrb[0].mxu0 %v151
    %v277 = vpop.f32.mrb[0].mxu0
    %v278 = vadd.f32 0.0, %v277
    %v279 = vpop.f32.mrb[0].mxu0
    %v280 = vpop.f32.mrb[0].mxu0
    %v281 = vadd.f32 0.0, %v280
    %v282 = vpop.f32.mrb[0].mxu0
    %283 = vmatprep.mubr.bf16.mxu0 0
    %284 = vmatmul.mubr.bf16.gmra.mrb[0].mxu0 %v152
    %v285 = vpop.f32.mrb[0].mxu0
    %v286 = vadd.f32 0.0, %v285
    %v287 = vpop.f32.mrb[0].mxu0
    %v288 = vpop.f32.mrb[0].mxu0
    %v289 = vadd.f32 0.0, %v288
    %v290 = vpop.f32.mrb[0].mxu0
    %291 = vmatprep.mubr.bf16.mxu0 0
    %292 = vmatmul.mubr.bf16.gmra.mrb[0].mxu0 %v153
    %v293 = vpop.f32.mrb[0].mxu0
    %v294 = vadd.f32 0.0, %v293
    %v295 = vpop.f32.mrb[0].mxu0
    %v296 = vpop.f32.mrb[0].mxu0
    %v297 = vadd.f32 0.0, %v296
    %v298 = vpop.f32.mrb[0].mxu0
    %299 = vmatprep.mubr.bf16.mxu0 0
    %300 = vmatmul.mubr.bf16.gmra.mrb[0].mxu0 %v154
    %v301 = vpop.f32.mrb[0].mxu0
    %v302 = vadd.f32 0.0, %v301
    %v303 = vpop.f32.mrb[0].mxu0
    %v304 = vpop.f32.mrb[0].mxu0
    %v305 = vadd.f32 0.0, %v304
    %v306 = vpop.f32.mrb[0].mxu0
    %307 = vdwg.mxu0
    %v308 = vadd.f32 %v67, %v246
    %v309 = vadd.f32 %v68, %v249
    %v310 = vadd.f32 %v69, %v254
    %v311 = vadd.f32 %v70, %v257
    %v312 = vadd.f32 %v71, %v262
    %v313 = vadd.f32 %v72, %v265
    %v314 = vadd.f32 %v73, %v270
    %v315 = vadd.f32 %v74, %v273
    %v316 = vadd.f32 %v75, %v278
    %v317 = vadd.f32 %v76, %v281
    %v318 = vadd.f32 %v77, %v286
    %v319 = vadd.f32 %v78, %v289
    %v320 = vadd.f32 %v79, %v294
    %v321 = vadd.f32 %v80, %v297
    %v322 = vadd.f32 %v81, %v302
    %v323 = vadd.f32 %v82, %v305
    %324 = vst [vmem:[#allocation2] sm:$0xff] %v308
    %325 = vst [vmem:[#allocation2 + $0x8] sm:$0xff] %v309
    %326 = vst [vmem:[#allocation2 + $0x10] sm:$0xff] %v310
    %327 = vst [vmem:[#allocation2 + $0x18] sm:$0xff] %v311
    %328 = vst [vmem:[#allocation2 + $0x20] sm:$0xff] %v312
    %329 = vst [vmem:[#allocation2 + $0x28] sm:$0xff] %v313
    %330 = vst [vmem:[#allocation2 + $0x30] sm:$0xff] %v314
    %331 = vst [vmem:[#allocation2 + $0x38] sm:$0xff] %v315
    %332 = vst [vmem:[#allocation2 + $0x40] sm:$0xff] %v316
    %333 = vst [vmem:[#allocation2 + $0x48] sm:$0xff] %v317
    %334 = vst [vmem:[#allocation2 + $0x50] sm:$0xff] %v318
    %335 = vst [vmem:[#allocation2 + $0x58] sm:$0xff] %v319
    %336 = vst [vmem:[#allocation2 + $0x60] sm:$0xff] %v320
    %337 = vst [vmem:[#allocation2 + $0x68] sm:$0xff] %v321
    %338 = vst [vmem:[#allocation2 + $0x70] sm:$0xff] %v322
    %339 = vst [vmem:[#allocation2 + $0x78] sm:$0xff] %v323
    // Predicated region
    $region30: #{tpu_custom_call.1} parent=1 // pred_check
      %p340 = pneg %p47
    $region31: #{tpu_custom_call.1} parent=1 // pred_check_branch
      %342 = sbr.rel (%p340) target = $region33
    $region32: #{tpu_custom_call.1} parent=1 // pred_region
      %v343 = vld [vmem:[#allocation2] sm:$0xff]
      %v344 = vld [vmem:[#allocation2 + $0x8] sm:$0xff]
      %v345 = vld [vmem:[#allocation2 + $0x10] sm:$0xff]
      %v346 = vld [vmem:[#allocation2 + $0x18] sm:$0xff]
      %v347 = vld [vmem:[#allocation2 + $0x20] sm:$0xff]
      %v348 = vld [vmem:[#allocation2 + $0x28] sm:$0xff]
      %v349 = vld [vmem:[#allocation2 + $0x30] sm:$0xff]
      %v350 = vld [vmem:[#allocation2 + $0x38] sm:$0xff]
      %v351 = vld [vmem:[#allocation2 + $0x40] sm:$0xff]
      %v352 = vld [vmem:[#allocation2 + $0x48] sm:$0xff]
      %v353 = vld [vmem:[#allocation2 + $0x50] sm:$0xff]
      %v354 = vld [vmem:[#allocation2 + $0x58] sm:$0xff]
      %v355 = vld [vmem:[#allocation2 + $0x60] sm:$0xff]
      %v356 = vld [vmem:[#allocation2 + $0x68] sm:$0xff]
      %v357 = vld [vmem:[#allocation2 + $0x70] sm:$0xff]
      %v358 = vld [vmem:[#allocation2 + $0x78] sm:$0xff]
      %v359 = vld [vmem:[%s2] sm:$0x1]
      %v361 = vlaneseq
      %v362 = vshrl.u32 %v361, 7
      %v363 = vsub.s32 0, %v362
      %v364 = vrot.slane %v359, %v363
      %v366 = vmul.f32 %v343, %v364
      %v367 = vmul.f32 %v344, %v364
      %v368 = vmul.f32 %v345, %v364
      %v369 = vmul.f32 %v346, %v364
      %v370 = vmul.f32 %v347, %v364
      %v371 = vmul.f32 %v348, %v364
      %v372 = vmul.f32 %v349, %v364
      %v373 = vmul.f32 %v350, %v364
      %v374 = vmul.f32 %v351, %v364
      %v375 = vmul.f32 %v352, %v364
      %v376 = vmul.f32 %v353, %v364
      %v377 = vmul.f32 %v354, %v364
      %v378 = vmul.f32 %v355, %v364
      %v379 = vmul.f32 %v356, %v364
      %v380 = vmul.f32 %v357, %v364
      %v381 = vmul.f32 %v358, %v364
      %v382 = vld [vmem:[%s3] sm:$0x1]
      %v384 = vlaneseq
      %v385 = vshrl.u32 %v384, 7
      %v386 = vsub.s32 0, %v385
      %v387 = vrot.slane %v382, %v386
      %v389 = vadd.f32 %v366, %v387
      %v390 = vadd.f32 %v367, %v387
      %v391 = vadd.f32 %v368, %v387
      %v392 = vadd.f32 %v369, %v387
      %v393 = vadd.f32 %v370, %v387
      %v394 = vadd.f32 %v371, %v387
      %v395 = vadd.f32 %v372, %v387
      %v396 = vadd.f32 %v373, %v387
      %v397 = vadd.f32 %v374, %v387
      %v398 = vadd.f32 %v375, %v387
      %v399 = vadd.f32 %v376, %v387
      %v400 = vadd.f32 %v377, %v387
      %v401 = vadd.f32 %v378, %v387
      %v402 = vadd.f32 %v379, %v387
      %v403 = vadd.f32 %v380, %v387
      %v404 = vadd.f32 %v381, %v387
      %v405 = vmax.f32 %v389, 0.0
      %v406 = vmax.f32 %v390, 0.0
      %v407 = vmax.f32 %v391, 0.0
      %v408 = vmax.f32 %v392, 0.0
      %v409 = vmax.f32 %v393, 0.0
      %v410 = vmax.f32 %v394, 0.0
      %v411 = vmax.f32 %v395, 0.0
      %v412 = vmax.f32 %v396, 0.0
      %v413 = vmax.f32 %v397, 0.0
      %v414 = vmax.f32 %v398, 0.0
      %v415 = vmax.f32 %v399, 0.0
      %v416 = vmax.f32 %v400, 0.0
      %v417 = vmax.f32 %v401, 0.0
      %v418 = vmax.f32 %v402, 0.0
      %v419 = vmax.f32 %v403, 0.0
      %v420 = vmax.f32 %v404, 0.0
      %421 = vst [vmem:[#allocation8] sm:$0xff] %v405
      %422 = vst [vmem:[#allocation8 + $0x8] sm:$0xff] %v406
      %423 = vst [vmem:[#allocation8 + $0x10] sm:$0xff] %v407
      %424 = vst [vmem:[#allocation8 + $0x18] sm:$0xff] %v408
      %425 = vst [vmem:[#allocation8 + $0x20] sm:$0xff] %v409
      %426 = vst [vmem:[#allocation8 + $0x28] sm:$0xff] %v410
      %427 = vst [vmem:[#allocation8 + $0x30] sm:$0xff] %v411
      %428 = vst [vmem:[#allocation8 + $0x38] sm:$0xff] %v412
      %429 = vst [vmem:[#allocation8 + $0x40] sm:$0xff] %v413
      %430 = vst [vmem:[#allocation8 + $0x48] sm:$0xff] %v414
      %431 = vst [vmem:[#allocation8 + $0x50] sm:$0xff] %v415
      %432 = vst [vmem:[#allocation8 + $0x58] sm:$0xff] %v416
      %433 = vst [vmem:[#allocation8 + $0x60] sm:$0xff] %v417
      %434 = vst [vmem:[#allocation8 + $0x68] sm:$0xff] %v418
      %435 = vst [vmem:[#allocation8 + $0x70] sm:$0xff] %v419
      %436 = vst [vmem:[#allocation8 + $0x78] sm:$0xff] %v420
    $region33: #{tpu_custom_call.1} parent=1 // pred_fallthru
      _
    // Predicated region
    $region34: #{tpu_custom_call.1} parent=1 // pred_check
      _
    $region35: #{tpu_custom_call.1} parent=1 // pred_check_branch
      %438 = sbr.rel (0) target = $region37
    $region36: #{tpu_custom_call.1} parent=1 // pred_region
      %s440 = ssub.s32 2048, 2048
      %441 = vsyncadd [#allocation5], %s440
      %s442 = sshll.u32 [#allocation8], 4
      %s443 = int_to_ptr.vmem [resolvable:$true] %s442
      %448 = dma.vmem_to_hbm [thread:$0]  %s443, 2048, %s4, [#allocation5], 128, 128, 8
    $region37: #{tpu_custom_call.1} parent=1 // pred_fallthru
      _
    // Predicated region
    $region38: #{tpu_custom_call.1} parent=1 // pred_check
      _
    $region39: #{tpu_custom_call.1} parent=1 // pred_check_branch
      %450 = sbr.rel (0) target = $region41
    $region40: #{tpu_custom_call.1} parent=1 // pred_region
      %451 = dma.done [#allocation5], 2048
    $region41: #{tpu_custom_call.1} parent=1 // pred_fallthru
      _
    %452 = vsyncpa [#allocation4], 1
    %453 = vsyncpa [#allocation7], 1
    %454 = vsyncpa [#allocation5], 1

</llo_original>
